<compile_context>
chip_gen: v6e
topology: v6e:2x2x1
jax: 0.10.0
libtpu: 0.0.40
codegen_flags: <defaults>
</compile_context>

<pallas_src>
import functools

import jax
import jax.numpy as jnp
import numpy as np
from jax.experimental import pallas as pl
from jax.experimental.pallas import tpu as pltpu

_VMEM_LIMIT = 32 * 1024 * 1024


def _pick_tn(m):
    for tn in (512, 256, 128):
        if m % tn == 0:
            return tn
    return m


# ------------------- fused GEMM + BatchNorm-stats kernel --------------------

def _gemm_stats_kernel(*refs, n_pairs):
    """Y[R, tn] = sum_p dot(W_p[R,Kp], A_p[Kp,tn]); accumulate per-row sum/sumsq."""
    o_ref = refs[2 * n_pairs]
    sum_ref = refs[2 * n_pairs + 1]
    sq_ref = refs[2 * n_pairs + 2]

    acc = jnp.dot(refs[0][...], refs[1][...], preferred_element_type=jnp.float32)
    for p in range(1, n_pairs):
        acc = acc + jnp.dot(refs[2 * p][...], refs[2 * p + 1][...],
                            preferred_element_type=jnp.float32)
    o_ref[...] = acc

    @pl.when(pl.program_id(0) == 0)
    def _():
        sum_ref[...] = jnp.zeros_like(sum_ref)
        sq_ref[...] = jnp.zeros_like(sq_ref)

    sum_ref[...] += jnp.sum(acc, axis=1, keepdims=True)
    sq_ref[...] += jnp.sum(acc * acc, axis=1, keepdims=True)


def gemm_with_stats(pairs):
    """pairs: [(W[R,K_p] bf16, A[K_p,M] bf16), ...] ->
       (Y[R,M] f32, row_sum[R,1] f32, row_sumsq[R,1] f32)."""
    R = pairs[0][0].shape[0]
    M = pairs[0][1].shape[1]
    tn = _pick_tn(M)
    operands, in_specs = [], []
    for w, a in pairs:
        K = w.shape[1]
        assert w.shape[0] == R and a.shape == (K, M)
        operands += [w, a]
        in_specs += [pl.BlockSpec((R, K), lambda i: (0, 0)),    # resident weight
                     pl.BlockSpec((K, tn), lambda i: (0, i))]
    return pl.pallas_call(
        functools.partial(_gemm_stats_kernel, n_pairs=len(pairs)),
        out_shape=(jax.ShapeDtypeStruct((R, M), jnp.float32),
                   jax.ShapeDtypeStruct((R, 1), jnp.float32),
                   jax.ShapeDtypeStruct((R, 1), jnp.float32)),
        grid=(M // tn,),
        in_specs=in_specs,
        out_specs=(pl.BlockSpec((R, tn), lambda i: (0, i)),
                   pl.BlockSpec((R, 1), lambda i: (0, 0)),
                   pl.BlockSpec((R, 1), lambda i: (0, 0))),
        compiler_params=pltpu.CompilerParams(
            dimension_semantics=("arbitrary",),     # stats accumulator is revisited
            vmem_limit_bytes=_VMEM_LIMIT),
    )(*operands)


# ---------------------- BN affine + activation kernel -----------------------

def _bn_act_kernel(y_ref, scale_ref, shift_ref, o_ref, *, slope):
    y = y_ref[...] * scale_ref[...] + shift_ref[...]
    o_ref[...] = jnp.where(y >= 0, y, slope * y)


def bn_act(y, scale_rows, shift_rows, *, slope):
    """y: [R, M] f32; per-row affine (precomputed BN scale/shift) + (Leaky)ReLU."""
    R, M = y.shape
    tn = _pick_tn(M)
    return pl.pallas_call(
        functools.partial(_bn_act_kernel, slope=slope),
        out_shape=jax.ShapeDtypeStruct((R, M), jnp.float32),
        grid=(M // tn,),
        in_specs=[pl.BlockSpec((R, tn), lambda i: (0, i)),
                  pl.BlockSpec((R, 1), lambda i: (0, 0)),
                  pl.BlockSpec((R, 1), lambda i: (0, 0))],
        out_specs=pl.BlockSpec((R, tn), lambda i: (0, i)),
        compiler_params=pltpu.CompilerParams(
            dimension_semantics=("parallel",),
            vmem_limit_bytes=_VMEM_LIMIT),
    )(y,
      scale_rows[:, None].astype(jnp.float32),
      shift_rows[:, None].astype(jnp.float32))


# ---------------------- im2col / weight-matrix plumbing ---------------------

def _im2col_down(x_nchw):
    """x: [N,Ci,H,W] -> A[(kh,kw,ci), (n,p,q)] for Conv2d(k4, s2, p1)."""
    N, Ci, H, W = x_nchw.shape
    Ho, Wo = H // 2, W // 2
    xp = jnp.pad(x_nchw, ((0, 0), (0, 0), (1, 1), (1, 1)))
    cols = jnp.stack(
        [jnp.stack([xp[:, :, kh:kh + 2 * Ho:2, kw:kw + 2 * Wo:2]
                    for kw in range(4)], axis=0)
         for kh in range(4)], axis=0)                      # [4,4,N,Ci,Ho,Wo]
    cols = jnp.transpose(cols, (0, 1, 3, 2, 4, 5))         # [4,4,Ci,N,Ho,Wo]
    return cols.reshape(16 * Ci, N * Ho * Wo)


def _w_down_mat(w):
    """[Co,Ci,4,4] -> [Co, (kh,kw,ci)]."""
    Co, Ci = w.shape[:2]
    return jnp.transpose(w, (0, 2, 3, 1)).reshape(Co, 16 * Ci)


def _im2col_up(z_chw):
    """z: [C,N,Hd,Wd] -> A9[(r,s,c), (n,p,q)] — 3x3 neighbourhood of padded z."""
    C, N, Hd, Wd = z_chw.shape
    zp = jnp.pad(z_chw, ((0, 0), (0, 0), (1, 1), (1, 1)))
    cols = jnp.stack(
        [jnp.stack([zp[:, :, r:r + Hd, s:s + Wd] for s in range(3)], axis=0)
         for r in range(3)], axis=0)                       # [3,3,C,N,Hd,Wd]
    return cols.reshape(9 * C, N * Hd * Wd)


def _w_up_parity_mat(w_half):
    """ConvTranspose2d(k4,s2,p1) weight half [C,Ci,4,4] -> block-sparse
       W9[(a,b,o), (r,s,c)] covering all 4 output parities in one GEMM.
       out[n, 2p+a, 2q+b, o] = sum_{r,s,c} W9[(a,b,o),(r,s,c)] * zpad[c,n,p+r,q+s]."""
    C, Ci = w_half.shape[:2]
    zero = jnp.zeros((Ci, C), w_half.dtype)
    parity_rows = []
    for a in range(2):
        for b in range(2):
            cols = []
            for r in range(3):
                for s in range(3):
                    if 0 <= r - a <= 1 and 0 <= s - b <= 1:
                        cols.append(jnp.transpose(
                            w_half[:, :, 3 + a - 2 * r, 3 + b - 2 * s]))   # [Ci, C]
                    else:
                        cols.append(zero)
            parity_rows.append(jnp.concatenate(cols, axis=1))              # [Ci, 9C]
    return jnp.concatenate(parity_rows, axis=0)                            # [4Ci, 9C]


def _bn_scale_shift(s, ss, count, gamma, beta, eps=1e-5):
    """Training-mode BatchNorm (batch stats, biased variance) as per-channel affine."""
    mean = s / count
    var = ss / count - mean * mean
    scale = gamma / jnp.sqrt(var + eps)
    shift = beta - mean * scale
    return scale, shift


# -------------------------------- full module --------------------------------

def unet_skip_forward(x_nchw, params, submodule=lambda d: d):
    x = x_nchw.astype(jnp.float32)
    N, Ci, H, W = x.shape
    Co = params["w_down"].shape[0]
    Ho, Wo = H // 2, W // 2
    M = N * Ho * Wo
    bf16 = jnp.bfloat16

    # -------- down: Conv(4,2,1) -> BN(batch stats) -> LeakyReLU(0.2) --------
    a_dn = _im2col_down(x.astype(bf16))                        # [16Ci, M] bf16
    w_dn = _w_down_mat(params["w_down"].astype(bf16))          # [Co, 16Ci] bf16
    y_dn, s_dn, ss_dn = gemm_with_stats([(w_dn, a_dn)])        # [Co, M] f32
    sc_dn, sh_dn = _bn_scale_shift(s_dn[:, 0], ss_dn[:, 0], M,
                                   params["g_down"], params["b_down"])
    d = bn_act(y_dn, sc_dn, sh_dn, slope=0.2)                  # [Co, M] f32
    d_chw = d.reshape(Co, N, Ho, Wo)

    # submodule keeps the PyTorch NCHW contract (identity here -> transposes fold away)
    sub_nchw = submodule(jnp.transpose(d_chw, (1, 0, 2, 3)))
    s_chw = jnp.transpose(sub_nchw, (1, 0, 2, 3))

    # ---- up: ConvTranspose(4,2,1) over cat([d, sub]) -> BN -> ReLU ----
    # cat is never materialized: the K dimension is split into the d-half and
    # the submodule-half and both GEMMs run inside one kernel; all 4 output
    # parities come out of the same GEMM as one lane-dense [4*Ci, M] slab.
    a_d = _im2col_up(d_chw.astype(bf16))                       # [9Co, M] bf16
    a_s = _im2col_up(s_chw.astype(bf16))                       # [9Co, M] bf16
    w_u = params["w_up"].astype(bf16)                          # [2Co, Ci, 4, 4]
    w_ud = _w_up_parity_mat(w_u[:Co])                          # [4Ci, 9Co]
    w_us = _w_up_parity_mat(w_u[Co:])                          # [4Ci, 9Co]
    y_up, s_up, ss_up = gemm_with_stats([(w_ud, a_d), (w_us, a_s)])   # [4Ci, M]

    # fold the 4 parity rows into per-channel stats; count = N*(2Ho)*(2Wo) = 4M
    s_c = s_up[:, 0].reshape(4, Ci).sum(axis=0)
    ss_c = ss_up[:, 0].reshape(4, Ci).sum(axis=0)
    sc_c, sh_c = _bn_scale_shift(s_c, ss_c, 4 * M, params["g_up"], params["b_up"])
    u = bn_act(y_up, jnp.tile(sc_c, 4), jnp.tile(sh_c, 4), slope=0.0)  # [4Ci, M]

    # interleave parities: (a,b,o,n,p,q) -> out[n,o,2p+a,2q+b]
    u = u.reshape(2, 2, Ci, N, Ho, Wo)
    u = jnp.transpose(u, (3, 2, 4, 0, 5, 1)).reshape(N, Ci, 2 * Ho, 2 * Wo)
    return u


# -------------------------- pure-JAX reference check -------------------------

def _ref_bn_act(y, gamma, beta, slope, eps=1e-5):
    mean = jnp.mean(y, axis=(0, 1, 2), keepdims=True)
    var = jnp.mean((y - mean) ** 2, axis=(0, 1, 2), keepdims=True)
    yh = (y - mean) / jnp.sqrt(var + eps) * gamma + beta
    return jnp.where(yh >= 0, yh, slope * yh)


def ref_forward(x_nchw, params, submodule=lambda d: d):
    bf16 = jnp.bfloat16
    x = jnp.transpose(x_nchw, (0, 2, 3, 1)).astype(jnp.float32)
    w_hwio = jnp.transpose(params["w_down"], (2, 3, 1, 0))
    d = jax.lax.conv_general_dilated(
        x.astype(bf16), w_hwio.astype(bf16), (2, 2), ((1, 1), (1, 1)),
        dimension_numbers=("NHWC", "HWIO", "NHWC"),
        preferred_element_type=jnp.float32)
    d = _ref_bn_act(d, params["g_down"], params["b_down"], 0.2)
    cat = jnp.concatenate([d, submodule(d)], axis=-1)
    w_flip = jnp.transpose(params["w_up"], (2, 3, 0, 1))[::-1, ::-1, :, :]
    u = jax.lax.conv_general_dilated(
        cat.astype(bf16), w_flip.astype(bf16), (1, 1), ((2, 2), (2, 2)),
        lhs_dilation=(2, 2),
        dimension_numbers=("NHWC", "HWIO", "NHWC"),
        preferred_element_type=jnp.float32)
    u = _ref_bn_act(u, params["g_up"], params["b_up"], 0.0)
    return jnp.transpose(u, (0, 3, 1, 2))


# ----------------------------------- main ------------------------------------

if __name__ == "__main__":
    in_channels, out_channels = 4, 8
    N, H, W = 2, 16, 16

    ks = jax.random.split(jax.random.PRNGKey(0), 7)
    params = {
        # Conv2d weight: [Cout, Cin, 4, 4]
        "w_down": 0.1 * jax.random.normal(ks[0], (out_channels, in_channels, 4, 4), jnp.float32),
        "g_down": 1.0 + 0.1 * jax.random.normal(ks[1], (out_channels,), jnp.float32),
        "b_down": 0.1 * jax.random.normal(ks[2], (out_channels,), jnp.float32),
        # ConvTranspose2d weight: [C_in(=2*Cout), C_out(=Cin), 4, 4]
        "w_up": 0.1 * jax.random.normal(ks[3], (2 * out_channels, in_channels, 4, 4), jnp.float32),
        "g_up": 1.0 + 0.1 * jax.random.normal(ks[4], (in_channels,), jnp.float32),
        "b_up": 0.1 * jax.random.normal(ks[5], (in_channels,), jnp.float32),
    }
    x = jax.random.normal(ks[6], (N, in_channels, H, W), jnp.float32)

    out = jax.jit(lambda xx: unet_skip_forward(xx, params))(x)
    out = jax.block_until_ready(out)

    ref = jax.block_until_ready(ref_forward(x, params))
    assert out.shape == (N, in_channels, H, W), out.shape
    # bf16 MXU operands in both paths; residual diff is accumulation order only.
    np.testing.assert_allclose(np.asarray(out), np.asarray(ref), rtol=5e-3, atol=5e-3)
    print("KERNEL_OK")
</pallas_src>

<mosaic_0001>
module attributes {stable_mosaic.version = 11 : i64} {
  func.func @_gemm_stats_kernel(%arg0: i32, %arg1: memref<8x64xbf16, #tpu.memory_space<vmem>>, %arg2: memref<64x128xbf16, #tpu.memory_space<vmem>>, %arg3: memref<8x128xf32, #tpu.memory_space<vmem>>, %arg4: memref<8x1xf32, #tpu.memory_space<vmem>>, %arg5: memref<8x1xf32, #tpu.memory_space<vmem>>) attributes {dimension_semantics = [#tpu.dimension_semantics<arbitrary>], iteration_bounds = array<i64: 1>, scalar_prefetch = 0 : i64, scratch_operands = 0 : i64, tpu.core_type = #tpu.core_type<tc>, window_params = [{pipeline_mode = #tpu.pipeline_mode<synchronous>, transform_indices = @transform_0, window_bounds = array<i64: 8, 64>}, {transform_indices = @transform_1, window_bounds = array<i64: 64, 128>}, {transform_indices = @transform_2, window_bounds = array<i64: 8, 128>}, {pipeline_mode = #tpu.pipeline_mode<synchronous>, transform_indices = @transform_3, window_bounds = array<i64: 8, 1>}, {pipeline_mode = #tpu.pipeline_mode<synchronous>, transform_indices = @transform_4, window_bounds = array<i64: 8, 1>}]} {
    %c0 = arith.constant 0 : index
    %c0_0 = arith.constant 0 : index
    %0 = vector.load %arg1[%c0, %c0_0] : memref<8x64xbf16, #tpu.memory_space<vmem>>, vector<8x64xbf16>
    %c0_1 = arith.constant 0 : index
    %c0_2 = arith.constant 0 : index
    %1 = vector.load %arg2[%c0_1, %c0_2] : memref<64x128xbf16, #tpu.memory_space<vmem>>, vector<64x128xbf16>
    %cst = arith.constant dense<0.000000e+00> : vector<8x128xf32>
    %2 = tpu.matmul %0, %1, %cst {dimension_numbers = #tpu.dot_dimension_numbers<[1], [0], [0], [1], [0, 0, 1, 1], [], []>} : vector<8x64xbf16>, vector<64x128xbf16>, vector<8x128xf32> -> vector<8x128xf32>
    %c0_3 = arith.constant 0 : index
    %c0_4 = arith.constant 0 : index
    %3 = vector.load %arg3[%c0_3, %c0_4] : memref<8x128xf32, #tpu.memory_space<vmem>>, vector<8x128xf32>
    tpu.vector_store %arg3[%c0_3, %c0_4], %2 {strides = array<i32>} : memref<8x128xf32, #tpu.memory_space<vmem>>, vector<8x128xf32>,
    %c0_i32 = arith.constant 0 : i32
    %4 = arith.cmpi eq, %arg0, %c0_i32 : i32
    %5 = arith.extui %4 : i1 to i32
    %c0_i32_5 = arith.constant 0 : i32
    %6 = arith.cmpi ne, %5, %c0_i32_5 : i32
    scf.if %6 {
      %cst_16 = arith.constant 0.000000e+00 : f32
      %18 = vector.broadcast %cst_16 : f32 to vector<8x1xf32>
      %c0_17 = arith.constant 0 : index
      %c0_18 = arith.constant 0 : index
      %19 = vector.load %arg4[%c0_17, %c0_18] : memref<8x1xf32, #tpu.memory_space<vmem>>, vector<8x1xf32>
      tpu.vector_store %arg4[%c0_17, %c0_18], %18 {strides = array<i32>} : memref<8x1xf32, #tpu.memory_space<vmem>>, vector<8x1xf32>,
      %cst_19 = arith.constant 0.000000e+00 : f32
      %20 = vector.broadcast %cst_19 : f32 to vector<8x1xf32>
      %c0_20 = arith.constant 0 : index
      %c0_21 = arith.constant 0 : index
      %21 = vector.load %arg5[%c0_20, %c0_21] : memref<8x1xf32, #tpu.memory_space<vmem>>, vector<8x1xf32>
      tpu.vector_store %arg5[%c0_20, %c0_21], %20 {strides = array<i32>} : memref<8x1xf32, #tpu.memory_space<vmem>>, vector<8x1xf32>,
    } else {
    }
    %c0_6 = arith.constant 0 : index
    %c0_7 = arith.constant 0 : index
    %7 = vector.load %arg4[%c0_6, %c0_7] : memref<8x1xf32, #tpu.memory_space<vmem>>, vector<8x1xf32>
    %cst_8 = arith.constant dense<0.000000e+00> : vector<8xf32>
    %8 = vector.multi_reduction <add>, %2, %cst_8 [1] : vector<8x128xf32> to vector<8xf32>
    %9 = vector.shape_cast %8 : vector<8xf32> to vector<8x1xf32>
    %10 = arith.addf %7, %9 : vector<8x1xf32>
    %c0_9 = arith.constant 0 : index
    %c0_10 = arith.constant 0 : index
    %11 = vector.load %arg4[%c0_9, %c0_10] : memref<8x1xf32, #tpu.memory_space<vmem>>, vector<8x1xf32>
    tpu.vector_store %arg4[%c0_9, %c0_10], %10 {strides = array<i32>} : memref<8x1xf32, #tpu.memory_space<vmem>>, vector<8x1xf32>,
    %c0_11 = arith.constant 0 : index
    %c0_12 = arith.constant 0 : index
    %12 = vector.load %arg5[%c0_11, %c0_12] : memref<8x1xf32, #tpu.memory_space<vmem>>, vector<8x1xf32>
    %13 = arith.mulf %2, %2 : vector<8x128xf32>
    %cst_13 = arith.constant dense<0.000000e+00> : vector<8xf32>
    %14 = vector.multi_reduction <add>, %13, %cst_13 [1] : vector<8x128xf32> to vector<8xf32>
    %15 = vector.shape_cast %14 : vector<8xf32> to vector<8x1xf32>
    %16 = arith.addf %12, %15 : vector<8x1xf32>
    %c0_14 = arith.constant 0 : index
    %c0_15 = arith.constant 0 : index
    %17 = vector.load %arg5[%c0_14, %c0_15] : memref<8x1xf32, #tpu.memory_space<vmem>>, vector<8x1xf32>
    tpu.vector_store %arg5[%c0_14, %c0_15], %16 {strides = array<i32>} : memref<8x1xf32, #tpu.memory_space<vmem>>, vector<8x1xf32>,
    return
  }
  func.func @transform_0(%arg0: i32) -> (i32, i32) {
    %c0_i32 = arith.constant 0 : i32
    %c0_i32_0 = arith.constant 0 : i32
    %c0_i32_1 = arith.constant 0 : i32
    return %c0_i32, %c0_i32_0 : i32, i32
  }
  func.func @transform_1(%arg0: i32) -> (i32, i32) {
    %c0_i32 = arith.constant 0 : i32
    %c0_i32_0 = arith.constant 0 : i32
    return %c0_i32, %arg0 : i32, i32
  }
  func.func @transform_2(%arg0: i32) -> (i32, i32) {
    %c0_i32 = arith.constant 0 : i32
    %c0_i32_0 = arith.constant 0 : i32
    return %c0_i32, %arg0 : i32, i32
  }
  func.func @transform_3(%arg0: i32) -> (i32, i32) {
    %c0_i32 = arith.constant 0 : i32
    %c0_i32_0 = arith.constant 0 : i32
    %c0_i32_1 = arith.constant 0 : i32
    return %c0_i32, %c0_i32_0 : i32, i32
  }
  func.func @transform_4(%arg0: i32) -> (i32, i32) {
    %c0_i32 = arith.constant 0 : i32
    %c0_i32_0 = arith.constant 0 : i32
    %c0_i32_1 = arith.constant 0 : i32
    return %c0_i32, %c0_i32_0 : i32, i32
  }
}

module attributes {stable_mosaic.version = 11 : i64} {
  func.func @_bn_act_kernel(%arg0: i32, %arg1: memref<8x128xf32, #tpu.memory_space<vmem>>, %arg2: memref<8x1xf32, #tpu.memory_space<vmem>>, %arg3: memref<8x1xf32, #tpu.memory_space<vmem>>, %arg4: memref<8x128xf32, #tpu.memory_space<vmem>>) attributes {dimension_semantics = [#tpu.dimension_semantics<parallel>], iteration_bounds = array<i64: 1>, scalar_prefetch = 0 : i64, scratch_operands = 0 : i64, tpu.core_type = #tpu.core_type<tc>, window_params = [{transform_indices = @transform_0, window_bounds = array<i64: 8, 128>}, {pipeline_mode = #tpu.pipeline_mode<synchronous>, transform_indices = @transform_1, window_bounds = array<i64: 8, 1>}, {pipeline_mode = #tpu.pipeline_mode<synchronous>, transform_indices = @transform_2, window_bounds = array<i64: 8, 1>}, {transform_indices = @transform_3, window_bounds = array<i64: 8, 128>}]} {
    %c0 = arith.constant 0 : index
    %c0_0 = arith.constant 0 : index
    %0 = vector.load %arg1[%c0, %c0_0] : memref<8x128xf32, #tpu.memory_space<vmem>>, vector<8x128xf32>
    %c0_1 = arith.constant 0 : index
    %c0_2 = arith.constant 0 : index
    %1 = vector.load %arg2[%c0_1, %c0_2] : memref<8x1xf32, #tpu.memory_space<vmem>>, vector<8x1xf32>
    %2 = vector.broadcast %1 : vector<8x1xf32> to vector<8x128xf32>
    %3 = arith.mulf %0, %2 : vector<8x128xf32>
    %c0_3 = arith.constant 0 : index
    %c0_4 = arith.constant 0 : index
    %4 = vector.load %arg3[%c0_3, %c0_4] : memref<8x1xf32, #tpu.memory_space<vmem>>, vector<8x1xf32>
    %5 = vector.broadcast %4 : vector<8x1xf32> to vector<8x128xf32>
    %6 = arith.addf %3, %5 : vector<8x128xf32>
    %cst = arith.constant 0.000000e+00 : f32
    %7 = vector.broadcast %cst : f32 to vector<8x128xf32>
    %8 = arith.cmpf oge, %6, %7 : vector<8x128xf32>
    %cst_5 = arith.constant 2.000000e-01 : f32
    %9 = vector.broadcast %cst_5 : f32 to vector<8x128xf32>
    %10 = arith.mulf %9, %6 : vector<8x128xf32>
    %11 = arith.select %8, %6, %10 : vector<8x128xi1>, vector<8x128xf32>
    %c0_6 = arith.constant 0 : index
    %c0_7 = arith.constant 0 : index
    %12 = vector.load %arg4[%c0_6, %c0_7] : memref<8x128xf32, #tpu.memory_space<vmem>>, vector<8x128xf32>
    tpu.vector_store %arg4[%c0_6, %c0_7], %11 {strides = array<i32>} : memref<8x128xf32, #tpu.memory_space<vmem>>, vector<8x128xf32>,
    return
  }
  func.func @transform_0(%arg0: i32) -> (i32, i32) {
    %c0_i32 = arith.constant 0 : i32
    %c0_i32_0 = arith.constant 0 : i32
    return %c0_i32, %arg0 : i32, i32
  }
  func.func @transform_1(%arg0: i32) -> (i32, i32) {
    %c0_i32 = arith.constant 0 : i32
    %c0_i32_0 = arith.constant 0 : i32
    %c0_i32_1 = arith.constant 0 : i32
    return %c0_i32, %c0_i32_0 : i32, i32
  }
  func.func @transform_2(%arg0: i32) -> (i32, i32) {
    %c0_i32 = arith.constant 0 : i32
    %c0_i32_0 = arith.constant 0 : i32
    %c0_i32_1 = arith.constant 0 : i32
    return %c0_i32, %c0_i32_0 : i32, i32
  }
  func.func @transform_3(%arg0: i32) -> (i32, i32) {
    %c0_i32 = arith.constant 0 : i32
    %c0_i32_0 = arith.constant 0 : i32
    return %c0_i32, %arg0 : i32, i32
  }
}

module attributes {stable_mosaic.version = 11 : i64} {
  func.func @_gemm_stats_kernel(%arg0: i32, %arg1: memref<16x72xbf16, #tpu.memory_space<vmem>>, %arg2: memref<72x128xbf16, #tpu.memory_space<vmem>>, %arg3: memref<16x72xbf16, #tpu.memory_space<vmem>>, %arg4: memref<72x128xbf16, #tpu.memory_space<vmem>>, %arg5: memref<16x128xf32, #tpu.memory_space<vmem>>, %arg6: memref<16x1xf32, #tpu.memory_space<vmem>>, %arg7: memref<16x1xf32, #tpu.memory_space<vmem>>) attributes {dimension_semantics = [#tpu.dimension_semantics<arbitrary>], iteration_bounds = array<i64: 1>, scalar_prefetch = 0 : i64, scratch_operands = 0 : i64, tpu.core_type = #tpu.core_type<tc>, window_params = [{pipeline_mode = #tpu.pipeline_mode<synchronous>, transform_indices = @transform_0, window_bounds = array<i64: 16, 72>}, {transform_indices = @transform_1, window_bounds = array<i64: 72, 128>}, {pipeline_mode = #tpu.pipeline_mode<synchronous>, transform_indices = @transform_2, window_bounds = array<i64: 16, 72>}, {transform_indices = @transform_3, window_bounds = array<i64: 72, 128>}, {transform_indices = @transform_4, window_bounds = array<i64: 16, 128>}, {pipeline_mode = #tpu.pipeline_mode<synchronous>, transform_indices = @transform_5, window_bounds = array<i64: 16, 1>}, {pipeline_mode = #tpu.pipeline_mode<synchronous>, transform_indices = @transform_6, window_bounds = array<i64: 16, 1>}]} {
    %c0 = arith.constant 0 : index
    %c0_0 = arith.constant 0 : index
    %0 = vector.load %arg1[%c0, %c0_0] : memref<16x72xbf16, #tpu.memory_space<vmem>>, vector<16x72xbf16>
    %c0_1 = arith.constant 0 : index
    %c0_2 = arith.constant 0 : index
    %1 = vector.load %arg2[%c0_1, %c0_2] : memref<72x128xbf16, #tpu.memory_space<vmem>>, vector<72x128xbf16>
    %cst = arith.constant dense<0.000000e+00> : vector<16x128xf32>
    %2 = tpu.matmul %0, %1, %cst {dimension_numbers = #tpu.dot_dimension_numbers<[1], [0], [0], [1], [0, 0, 1, 1], [], []>} : vector<16x72xbf16>, vector<72x128xbf16>, vector<16x128xf32> -> vector<16x128xf32>
    %c0_3 = arith.constant 0 : index
    %c0_4 = arith.constant 0 : index
    %3 = vector.load %arg3[%c0_3, %c0_4] : memref<16x72xbf16, #tpu.memory_space<vmem>>, vector<16x72xbf16>
    %c0_5 = arith.constant 0 : index
    %c0_6 = arith.constant 0 : index
    %4 = vector.load %arg4[%c0_5, %c0_6] : memref<72x128xbf16, #tpu.memory_space<vmem>>, vector<72x128xbf16>
    %cst_7 = arith.constant dense<0.000000e+00> : vector<16x128xf32>
    %5 = tpu.matmul %3, %4, %cst_7 {dimension_numbers = #tpu.dot_dimension_numbers<[1], [0], [0], [1], [0, 0, 1, 1], [], []>} : vector<16x72xbf16>, vector<72x128xbf16>, vector<16x128xf32> -> vector<16x128xf32>
    %6 = arith.addf %2, %5 : vector<16x128xf32>
    %c0_8 = arith.constant 0 : index
    %c0_9 = arith.constant 0 : index
    %7 = vector.load %arg5[%c0_8, %c0_9] : memref<16x128xf32, #tpu.memory_space<vmem>>, vector<16x128xf32>
    tpu.vector_store %arg5[%c0_8, %c0_9], %6 {strides = array<i32>} : memref<16x128xf32, #tpu.memory_space<vmem>>, vector<16x128xf32>,
    %c0_i32 = arith.constant 0 : i32
    %8 = arith.cmpi eq, %arg0, %c0_i32 : i32
    %9 = arith.extui %8 : i1 to i32
    %c0_i32_10 = arith.constant 0 : i32
    %10 = arith.cmpi ne, %9, %c0_i32_10 : i32
    scf.if %10 {
      %cst_21 = arith.constant 0.000000e+00 : f32
      %22 = vector.broadcast %cst_21 : f32 to vector<16x1xf32>
      %c0_22 = arith.constant 0 : index
      %c0_23 = arith.constant 0 : index
      %23 = vector.load %arg6[%c0_22, %c0_23] : memref<16x1xf32, #tpu.memory_space<vmem>>, vector<16x1xf32>
      tpu.vector_store %arg6[%c0_22, %c0_23], %22 {strides = array<i32>} : memref<16x1xf32, #tpu.memory_space<vmem>>, vector<16x1xf32>,
      %cst_24 = arith.constant 0.000000e+00 : f32
      %24 = vector.broadcast %cst_24 : f32 to vector<16x1xf32>
      %c0_25 = arith.constant 0 : index
      %c0_26 = arith.constant 0 : index
      %25 = vector.load %arg7[%c0_25, %c0_26] : memref<16x1xf32, #tpu.memory_space<vmem>>, vector<16x1xf32>
      tpu.vector_store %arg7[%c0_25, %c0_26], %24 {strides = array<i32>} : memref<16x1xf32, #tpu.memory_space<vmem>>, vector<16x1xf32>,
    } else {
    }
    %c0_11 = arith.constant 0 : index
    %c0_12 = arith.constant 0 : index
    %11 = vector.load %arg6[%c0_11, %c0_12] : memref<16x1xf32, #tpu.memory_space<vmem>>, vector<16x1xf32>
    %cst_13 = arith.constant dense<0.000000e+00> : vector<16xf32>
    %12 = vector.multi_reduction <add>, %6, %cst_13 [1] : vector<16x128xf32> to vector<16xf32>
    %13 = vector.shape_cast %12 : vector<16xf32> to vector<16x1xf32>
    %14 = arith.addf %11, %13 : vector<16x1xf32>
    %c0_14 = arith.constant 0 : index
    %c0_15 = arith.constant 0 : index
    %15 = vector.load %arg6[%c0_14, %c0_15] : memref<16x1xf32, #tpu.memory_space<vmem>>, vector<16x1xf32>
    tpu.vector_store %arg6[%c0_14, %c0_15], %14 {strides = array<i32>} : memref<16x1xf32, #tpu.memory_space<vmem>>, vector<16x1xf32>,
    %c0_16 = arith.constant 0 : index
    %c0_17 = arith.constant 0 : index
    %16 = vector.load %arg7[%c0_16, %c0_17] : memref<16x1xf32, #tpu.memory_space<vmem>>, vector<16x1xf32>
    %17 = arith.mulf %6, %6 : vector<16x128xf32>
    %cst_18 = arith.constant dense<0.000000e+00> : vector<16xf32>
    %18 = vector.multi_reduction <add>, %17, %cst_18 [1] : vector<16x128xf32> to vector<16xf32>
    %19 = vector.shape_cast %18 : vector<16xf32> to vector<16x1xf32>
    %20 = arith.addf %16, %19 : vector<16x1xf32>
    %c0_19 = arith.constant 0 : index
    %c0_20 = arith.constant 0 : index
    %21 = vector.load %arg7[%c0_19, %c0_20] : memref<16x1xf32, #tpu.memory_space<vmem>>, vector<16x1xf32>
    tpu.vector_store %arg7[%c0_19, %c0_20], %20 {strides = array<i32>} : memref<16x1xf32, #tpu.memory_space<vmem>>, vector<16x1xf32>,
    return
  }
  func.func @transform_0(%arg0: i32) -> (i32, i32) {
    %c0_i32 = arith.constant 0 : i32
    %c0_i32_0 = arith.constant 0 : i32
    %c0_i32_1 = arith.constant 0 : i32
    return %c0_i32, %c0_i32_0 : i32, i32
  }
  func.func @transform_1(%arg0: i32) -> (i32, i32) {
    %c0_i32 = arith.constant 0 : i32
    %c0_i32_0 = arith.constant 0 : i32
    return %c0_i32, %arg0 : i32, i32
  }
  func.func @transform_2(%arg0: i32) -> (i32, i32) {
    %c0_i32 = arith.constant 0 : i32
    %c0_i32_0 = arith.constant 0 : i32
    %c0_i32_1 = arith.constant 0 : i32
    return %c0_i32, %c0_i32_0 : i32, i32
  }
  func.func @transform_3(%arg0: i32) -> (i32, i32) {
    %c0_i32 = arith.constant 0 : i32
    %c0_i32_0 = arith.constant 0 : i32
    return %c0_i32, %arg0 : i32, i32
  }
  func.func @transform_4(%arg0: i32) -> (i32, i32) {
    %c0_i32 = arith.constant 0 : i32
    %c0_i32_0 = arith.constant 0 : i32
    return %c0_i32, %arg0 : i32, i32
  }
  func.func @transform_5(%arg0: i32) -> (i32, i32) {
    %c0_i32 = arith.constant 0 : i32
    %c0_i32_0 = arith.constant 0 : i32
    %c0_i32_1 = arith.constant 0 : i32
    return %c0_i32, %c0_i32_0 : i32, i32
  }
  func.func @transform_6(%arg0: i32) -> (i32, i32) {
    %c0_i32 = arith.constant 0 : i32
    %c0_i32_0 = arith.constant 0 : i32
    %c0_i32_1 = arith.constant 0 : i32
    return %c0_i32, %c0_i32_0 : i32, i32
  }
}

module attributes {stable_mosaic.version = 11 : i64} {
  func.func @_bn_act_kernel(%arg0: i32, %arg1: memref<16x128xf32, #tpu.memory_space<vmem>>, %arg2: memref<16x1xf32, #tpu.memory_space<vmem>>, %arg3: memref<16x1xf32, #tpu.memory_space<vmem>>, %arg4: memref<16x128xf32, #tpu.memory_space<vmem>>) attributes {dimension_semantics = [#tpu.dimension_semantics<parallel>], iteration_bounds = array<i64: 1>, scalar_prefetch = 0 : i64, scratch_operands = 0 : i64, tpu.core_type = #tpu.core_type<tc>, window_params = [{transform_indices = @transform_0, window_bounds = array<i64: 16, 128>}, {pipeline_mode = #tpu.pipeline_mode<synchronous>, transform_indices = @transform_1, window_bounds = array<i64: 16, 1>}, {pipeline_mode = #tpu.pipeline_mode<synchronous>, transform_indices = @transform_2, window_bounds = array<i64: 16, 1>}, {transform_indices = @transform_3, window_bounds = array<i64: 16, 128>}]} {
    %c0 = arith.constant 0 : index
    %c0_0 = arith.constant 0 : index
    %0 = vector.load %arg1[%c0, %c0_0] : memref<16x128xf32, #tpu.memory_space<vmem>>, vector<16x128xf32>
    %c0_1 = arith.constant 0 : index
    %c0_2 = arith.constant 0 : index
    %1 = vector.load %arg2[%c0_1, %c0_2] : memref<16x1xf32, #tpu.memory_space<vmem>>, vector<16x1xf32>
    %2 = vector.broadcast %1 : vector<16x1xf32> to vector<16x128xf32>
    %3 = arith.mulf %0, %2 : vector<16x128xf32>
    %c0_3 = arith.constant 0 : index
    %c0_4 = arith.constant 0 : index
    %4 = vector.load %arg3[%c0_3, %c0_4] : memref<16x1xf32, #tpu.memory_space<vmem>>, vector<16x1xf32>
    %5 = vector.broadcast %4 : vector<16x1xf32> to vector<16x128xf32>
    %6 = arith.addf %3, %5 : vector<16x128xf32>
    %cst = arith.constant 0.000000e+00 : f32
    %7 = vector.broadcast %cst : f32 to vector<16x128xf32>
    %8 = arith.cmpf oge, %6, %7 : vector<16x128xf32>
    %cst_5 = arith.constant 0.000000e+00 : f32
    %9 = vector.broadcast %cst_5 : f32 to vector<16x128xf32>
    %10 = arith.mulf %9, %6 : vector<16x128xf32>
    %11 = arith.select %8, %6, %10 : vector<16x128xi1>, vector<16x128xf32>
    %c0_6 = arith.constant 0 : index
    %c0_7 = arith.constant 0 : index
    %12 = vector.load %arg4[%c0_6, %c0_7] : memref<16x128xf32, #tpu.memory_space<vmem>>, vector<16x128xf32>
    tpu.vector_store %arg4[%c0_6, %c0_7], %11 {strides = array<i32>} : memref<16x128xf32, #tpu.memory_space<vmem>>, vector<16x128xf32>,
    return
  }
  func.func @transform_0(%arg0: i32) -> (i32, i32) {
    %c0_i32 = arith.constant 0 : i32
    %c0_i32_0 = arith.constant 0 : i32
    return %c0_i32, %arg0 : i32, i32
  }
  func.func @transform_1(%arg0: i32) -> (i32, i32) {
    %c0_i32 = arith.constant 0 : i32
    %c0_i32_0 = arith.constant 0 : i32
    %c0_i32_1 = arith.constant 0 : i32
    return %c0_i32, %c0_i32_0 : i32, i32
  }
  func.func @transform_2(%arg0: i32) -> (i32, i32) {
    %c0_i32 = arith.constant 0 : i32
    %c0_i32_0 = arith.constant 0 : i32
    %c0_i32_1 = arith.constant 0 : i32
    return %c0_i32, %c0_i32_0 : i32, i32
  }
  func.func @transform_3(%arg0: i32) -> (i32, i32) {
    %c0_i32 = arith.constant 0 : i32
    %c0_i32_0 = arith.constant 0 : i32
    return %c0_i32, %arg0 : i32, i32
  }
}

</mosaic_0001>

<llo_original>
// kernel: _lambda_.4
$region0: #{_lambda_.4}
  #allocation0 [shape = 'u32[]', space=smem, size = 0x4, offset = 0x4, fixed_abs, tag = 'smem constant byte address 0x4 - core index']
  #allocation1 [shape = 'u32[144,128]{1,0:T(1,128)}', space=vmem, size = 0x12000, scoped, tag = 'internal scratch']
  %s0 = inlined_call_operand.vmem [shape: bf16[8,64], index: 0, kind: input, shape index: {}]
  %s1 = inlined_call_operand.vmem [shape: bf16[64,128], index: 1, kind: input, shape index: {}]
  %s2 = inlined_call_operand.vmem [shape: f32[8,128], index: 2, kind: output, shape index: {0}]
  %s3 = inlined_call_operand.vmem [shape: f32[8,1], index: 3, kind: output, shape index: {1}]
  %s4 = inlined_call_operand.vmem [shape: f32[8,1], index: 4, kind: output, shape index: {2}]
  %5 = xla_tuple %s2, %s3, %s4
  %s6 = sld [smem:[#allocation0]]
  $region38: #{_lambda_.4} parent=0
    _
  %s8 = ssub.s32 1, %s6
  %s9 = scalar_select 0, %s8, %s6
  // Predicated region
  $region2: #{_lambda_.4} parent=0 // pred_check
    _
  $region3: #{_lambda_.4} parent=0 // pred_check_branch
    %11 = sbr.rel (0) target = $region5
  $region4: #{_lambda_.4} parent=0 // pred_region
    _
  $region5: #{_lambda_.4} parent=0 // pred_fallthru
    _
  // Predicated region
  $region6: #{_lambda_.4} parent=0 // pred_check
    _
  $region7: #{_lambda_.4} parent=0 // pred_check_branch
    %13 = sbr.rel (0) target = $region9
  $region8: #{_lambda_.4} parent=0 // pred_region
    _
  $region9: #{_lambda_.4} parent=0 // pred_fallthru
    _
  %v15 = vld [vmem:[%s0] sm:$0xf]
  %v16 = vld [vmem:[%s1] sm:$0xf]
  %v17 = vld [vmem:[%s1 + $0x4] sm:$0xf]
  %v18 = vld [vmem:[%s1 + $0x8] sm:$0xf]
  %v19 = vld [vmem:[%s1 + $0xc] sm:$0xf]
  %v20 = vld [vmem:[%s1 + $0x10] sm:$0xf]
  %v21 = vld [vmem:[%s1 + $0x14] sm:$0xf]
  %v22 = vld [vmem:[%s1 + $0x18] sm:$0xf]
  %v23 = vld [vmem:[%s1 + $0x1c] sm:$0xf]
  %v32 = vunpack.c.l.b16 %v16
  %v33 = vunpack.c.l.b16 %v17
  %v34 = vunpack.c.l.b16 %v18
  %v35 = vunpack.c.l.b16 %v19
  %v36 = vunpack.c.l.b16 %v20
  %v37 = vunpack.c.l.b16 %v21
  %v38 = vunpack.c.l.b16 %v22
  %v39 = vunpack.c.l.b16 %v23
  %v40 = vpack.c.b16 %v33, %v32
  %v41 = vpack.c.b16 %v35, %v34
  %v42 = vpack.c.b16 %v37, %v36
  %v43 = vpack.c.b16 %v39, %v38
  %vm48 = vcmask 523264
  %v50 = vsel %vm48, %v15, 0
  %52 = vmatprep.subr.bf16.mxu0 0
  %53 = vmatpush1.bf16.msra.mxu0 0
  %54 = vmatprep.subr.bf16.mxu0 0
  %55 = vmatpush1.bf16.msra.mxu0 0
  %56 = vmatprep.subr.bf16.mxu0 0
  %57 = vmatpush1.bf16.msra.mxu0 0
  %58 = vmatprep.subr.bf16.mxu0 0
  %59 = vmatpush1.bf16.msra.mxu0 0
  %60 = vmatprep.subr.bf16.mxu0 0
  %61 = vmatpush1.bf16.msra.mxu0 %v43
  %62 = vmatprep.subr.bf16.mxu0 0
  %63 = vmatpush1.bf16.msra.mxu0 %v42
  %64 = vmatprep.subr.bf16.mxu0 0
  %65 = vmatpush1.bf16.msra.mxu0 %v41
  %66 = vmatprep.subr.bf16.mxu0 0
  %67 = vmatpush1.bf16.msra.mxu0 %v40
  %68 = vmatprep.subr.bf16.mxu0 0
  %69 = vmatpush2.bf16.msra.mxu0 0
  %70 = vmatprep.subr.bf16.mxu0 0
  %71 = vmatpush2.bf16.msra.mxu0 0
  %72 = vmatprep.subr.bf16.mxu0 0
  %73 = vmatpush2.bf16.msra.mxu0 0
  %74 = vmatprep.subr.bf16.mxu0 0
  %75 = vmatpush2.bf16.msra.mxu0 0
  %76 = vmatprep.subr.bf16.mxu0 0
  %77 = vmatpush2.bf16.msra.mxu0 0
  %78 = vmatprep.subr.bf16.mxu0 0
  %79 = vmatpush2.bf16.msra.mxu0 0
  %80 = vmatprep.subr.bf16.mxu0 0
  %81 = vmatpush2.bf16.msra.mxu0 0
  %82 = vmatprep.subr.bf16.mxu0 0
  %83 = vmatpush2.bf16.msra.mxu0 0
  %84 = vmatprep.mubr.bf16.mxu0 0
  %85 = vmatmul.mubr.bf16.gmra.mxu0 %v50
  %v86 = vpop.f32.mrf.mxu0
  %v87 = vadd.f32 0.0, %v86
  %v88 = vpop.f32.mrf.mxu0
  %v89 = vpop.f32.mrf.mxu0
  %v90 = vpop.f32.mrf.mxu0
  %91 = vdwg.mxu0
  %92 = vst [vmem:[%s2] sm:$0xff] %v87
  %p93 = scmp.eq.s32.totalorder 0, 0
  // Predicated region
  $region10: #{_lambda_.4} parent=0 // pred_check
    %p94 = pneg %p93
  $region11: #{_lambda_.4} parent=0 // pred_check_branch
    %96 = sbr.rel (%p94) target = $region13
  $region12: #{_lambda_.4} parent=0 // pred_region
    %vm97 = vcmask 7168
    %98 = vst.msk [vmem:[%s3] sm:$0xff] %vm97, 0.0
    %99 = vst.msk [vmem:[%s4] sm:$0xff] %vm97, 0.0
  $region13: #{_lambda_.4} parent=0 // pred_fallthru
    _
  %v100 = vld [vmem:[%s3] sm:$0xff]
  %101 = vadd.xlane.f32.xlu0 %v87
  %v102 = vpop.xlane.xlu0 %101
  %v103 = vadd.f32 %v100, %v102
  %vm104 = vcmask 7168
  %105 = vst.msk [vmem:[%s3] sm:$0xff] %vm104, %v103
  %v106 = vld [vmem:[%s4] sm:$0xff]
  %v107 = vmul.f32 %v87, %v87
  %108 = vadd.xlane.f32.xlu0 %v107
  %v109 = vpop.xlane.xlu0 %108
  %v110 = vadd.f32 %v106, %v109
  %111 = vst.msk [vmem:[%s4] sm:$0xff] %vm104, %v110
  // Predicated region
  $region14: #{_lambda_.4} parent=0 // pred_check
    _
  $region15: #{_lambda_.4} parent=0 // pred_check_branch
    %113 = sbr.rel (0) target = $region17
  $region16: #{_lambda_.4} parent=0 // pred_region
    _
  $region17: #{_lambda_.4} parent=0 // pred_fallthru
    _
  // Predicated region
  $region18: #{_lambda_.4} parent=0 // pred_check
    _
  $region19: #{_lambda_.4} parent=0 // pred_check_branch
    %115 = sbr.rel (0) target = $region21
  $region20: #{_lambda_.4} parent=0 // pred_region
    _
  $region21: #{_lambda_.4} parent=0 // pred_fallthru
    _
  // Predicated region
  $region22: #{_lambda_.4} parent=0 // pred_check
    _
  $region23: #{_lambda_.4} parent=0 // pred_check_branch
    %117 = sbr.rel (0) target = $region25
  $region24: #{_lambda_.4} parent=0 // pred_region
    _
  $region25: #{_lambda_.4} parent=0 // pred_fallthru
    _
  // Predicated region
  $region26: #{_lambda_.4} parent=0 // pred_check
    _
  $region27: #{_lambda_.4} parent=0 // pred_check_branch
    %119 = sbr.rel (0) target = $region29
  $region28: #{_lambda_.4} parent=0 // pred_region
    _
  $region29: #{_lambda_.4} parent=0 // pred_fallthru
    _
  // Predicated region
  $region30: #{_lambda_.4} parent=0 // pred_check
    _
  $region31: #{_lambda_.4} parent=0 // pred_check_branch
    %121 = sbr.rel (0) target = $region33
  $region32: #{_lambda_.4} parent=0 // pred_region
    _
  $region33: #{_lambda_.4} parent=0 // pred_fallthru
    _
  // Predicated region
  $region34: #{_lambda_.4} parent=0 // pred_check
    _
  $region35: #{_lambda_.4} parent=0 // pred_check_branch
    %123 = sbr.rel (0) target = $region37
  $region36: #{_lambda_.4} parent=0 // pred_region
    _
  $region37: #{_lambda_.4} parent=0 // pred_fallthru
    _

// kernel: _lambda_.5
$region0: #{_lambda_.5}
  #allocation0 [shape = 'u32[]', space=smem, size = 0x4, offset = 0x4, fixed_abs, tag = 'smem constant byte address 0x4 - core index']
  #allocation1 [shape = 'u32[144,128]{1,0:T(1,128)}', space=vmem, size = 0x12000, scoped, tag = 'internal scratch']
  %s0 = inlined_call_operand.vmem [shape: f32[8,128], index: 0, kind: input, shape index: {}]
  %s1 = inlined_call_operand.vmem [shape: f32[8,1], index: 1, kind: input, shape index: {}]
  %s2 = inlined_call_operand.vmem [shape: f32[8,1], index: 2, kind: input, shape index: {}]
  %s3 = inlined_call_operand.vmem [shape: f32[8,128], index: 3, kind: output, shape index: {}]
  %s4 = sld [smem:[#allocation0]]
  $region22: #{_lambda_.5} parent=0
    _
  %s6 = ssub.s32 1, %s4
  %s7 = scalar_select 0, %s6, %s4
  // Predicated region
  $region2: #{_lambda_.5} parent=0 // pred_check
    _
  $region3: #{_lambda_.5} parent=0 // pred_check_branch
    %9 = sbr.rel (0) target = $region5
  $region4: #{_lambda_.5} parent=0 // pred_region
    _
  $region5: #{_lambda_.5} parent=0 // pred_fallthru
    _
  // Predicated region
  $region6: #{_lambda_.5} parent=0 // pred_check
    _
  $region7: #{_lambda_.5} parent=0 // pred_check_branch
    %11 = sbr.rel (0) target = $region9
  $region8: #{_lambda_.5} parent=0 // pred_region
    _
  $region9: #{_lambda_.5} parent=0 // pred_fallthru
    _
  // Predicated region
  $region10: #{_lambda_.5} parent=0 // pred_check
    _
  $region11: #{_lambda_.5} parent=0 // pred_check_branch
    %13 = sbr.rel (0) target = $region13
  $region12: #{_lambda_.5} parent=0 // pred_region
    _
  $region13: #{_lambda_.5} parent=0 // pred_fallthru
    _
  %v14 = vld [vmem:[%s0] sm:$0xff]
  %v15 = vld [vmem:[%s1] sm:$0xff]
  %17 = vset.pattern.permute.xlu0 0
  %18 = vperm.xlu0 %17, %v15
  %v19 = vpop.permute.xlu0 %18
  %v21 = vmul.f32 %v14, %v19
  %v22 = vld [vmem:[%s2] sm:$0xff]
  %24 = vset.pattern.permute.xlu0 0
  %25 = vperm.xlu0 %24, %v22
  %v26 = vpop.permute.xlu0 %25
  %v28 = vadd.f32 %v21, %v26
  %vm29 = vcmp.ge.f32.partialorder %v28, 0.0
  %v30 = vmul.f32 %v28, 0.2
  %v31 = vsel %vm29, %v28, %v30
  %32 = vst [vmem:[%s3] sm:$0xff] %v31
  // Predicated region
  $region14: #{_lambda_.5} parent=0 // pred_check
    _
  $region15: #{_lambda_.5} parent=0 // pred_check_branch
    %34 = sbr.rel (0) target = $region17
  $region16: #{_lambda_.5} parent=0 // pred_region
    _
  $region17: #{_lambda_.5} parent=0 // pred_fallthru
    _
  // Predicated region
  $region18: #{_lambda_.5} parent=0 // pred_check
    _
  $region19: #{_lambda_.5} parent=0 // pred_check_branch
    %36 = sbr.rel (0) target = $region21
  $region20: #{_lambda_.5} parent=0 // pred_region
    _
  $region21: #{_lambda_.5} parent=0 // pred_fallthru
    _

// kernel: squeeze.6
$region0: #{squeeze.6}
  %s0 = inlined_call_operand.vmem [shape: f32[16], index: 0, kind: input, shape index: {}]
  %s1 = inlined_call_operand.vmem [shape: f32[4,4], index: 1, kind: output, shape index: {}]
  $region1: #{squeeze.6} parent=0
    #allocation0 [shape = 'u8[4096]{0}', space=vmem, size = 0x1000, scoped, tag = 'scoped mem for output reshape']
    #allocation1 [shape = 'u8[4096]{0}', space=vmem, size = 0x1000, scoped, tag = 'scoped mem for input reshape']
    %s3 = sshll.u32 1, 1
    %s4 = ssub.s32 %s3, 1
    %v5 = vld [vmem:[%s0] sm:%s4]
    %6 = vst [vmem:[#allocation1] sm:%s4] %v5
    %v7 = vld [vmem:[#allocation1] sm:$0x1]
    %vm8 = vcmask 31744
    %9 = vst.msk [vmem:[#allocation0] sm:$0x1] %vm8, %v7
    %v10 = vld [vmem:[#allocation1] sm:$0x1]
    %11 = vrot.lane.b32.xlu0 %v10, 124
    %v12 = vpop.permute.xlu0 %11
    %vm13 = vcmask 31744
    %s14 = scalar_lea.vmem [#allocation0], 1
    %15 = vst.msk [vmem:[%s14] sm:$0x1] %vm13, %v12
    %v16 = vld [vmem:[#allocation1] sm:$0x1]
    %17 = vrot.lane.b32.xlu0 %v16, 120
    %v18 = vpop.permute.xlu0 %17
    %vm19 = vcmask 31744
    %s20 = scalar_lea.vmem [#allocation0], 2
    %21 = vst.msk [vmem:[%s20] sm:$0x1] %vm19, %v18
    %v22 = vld [vmem:[#allocation1] sm:$0x1]
    %23 = vrot.lane.b32.xlu0 %v22, 116
    %v24 = vpop.permute.xlu0 %23
    %vm25 = vcmask 31744
    %s26 = scalar_lea.vmem [#allocation0], 3
    %27 = vst.msk [vmem:[%s26] sm:$0x1] %vm25, %v24
    %s29 = sshll.u32 1, 4
    %s30 = ssub.s32 %s29, 1
    %v32 = vld [vmem:[#allocation0] sm:%s30]
    %s33 = sshll.u32 1, 4
    %s34 = ssub.s32 %s33, 1
    %35 = vst [vmem:[%s1] sm:%s34] %v32

// kernel: _lambda_.6
$region0: #{_lambda_.6}
  #allocation0 [shape = 'u32[]', space=smem, size = 0x4, offset = 0x4, fixed_abs, tag = 'smem constant byte address 0x4 - core index']
  #allocation1 [shape = 'u32[144,128]{1,0:T(1,128)}', space=vmem, size = 0x12000, scoped, tag = 'internal scratch']
  %s0 = inlined_call_operand.vmem [shape: bf16[16,72], index: 0, kind: input, shape index: {}]
  %s1 = inlined_call_operand.vmem [shape: bf16[72,128], index: 1, kind: input, shape index: {}, may-alias: {1,3}]
  %s2 = inlined_call_operand.vmem [shape: bf16[16,72], index: 2, kind: input, shape index: {}]
  %s3 = inlined_call_operand.vmem [shape: bf16[72,128], index: 3, kind: input, shape index: {}, may-alias: {1,3}]
  %s4 = inlined_call_operand.vmem [shape: f32[16,128], index: 4, kind: output, shape index: {0}]
  %s5 = inlined_call_operand.vmem [shape: f32[16,1], index: 5, kind: output, shape index: {1}]
  %s6 = inlined_call_operand.vmem [shape: f32[16,1], index: 6, kind: output, shape index: {2}]
  %7 = xla_tuple %s4, %s5, %s6
  %s8 = sld [smem:[#allocation0]]
  $region46: #{_lambda_.6} parent=0
    _
  %s10 = ssub.s32 1, %s8
  %s11 = scalar_select 0, %s10, %s8
  // Predicated region
  $region2: #{_lambda_.6} parent=0 // pred_check
    _
  $region3: #{_lambda_.6} parent=0 // pred_check_branch
    %13 = sbr.rel (0) target = $region5
  $region4: #{_lambda_.6} parent=0 // pred_region
    _
  $region5: #{_lambda_.6} parent=0 // pred_fallthru
    _
  // Predicated region
  $region6: #{_lambda_.6} parent=0 // pred_check
    _
  $region7: #{_lambda_.6} parent=0 // pred_check_branch
    %15 = sbr.rel (0) target = $region9
  $region8: #{_lambda_.6} parent=0 // pred_region
    _
  $region9: #{_lambda_.6} parent=0 // pred_fallthru
    _
  // Predicated region
  $region10: #{_lambda_.6} parent=0 // pred_check
    _
  $region11: #{_lambda_.6} parent=0 // pred_check_branch
    %17 = sbr.rel (0) target = $region13
  $region12: #{_lambda_.6} parent=0 // pred_region
    _
  $region13: #{_lambda_.6} parent=0 // pred_fallthru
    _
  // Predicated region
  $region14: #{_lambda_.6} parent=0 // pred_check
    _
  $region15: #{_lambda_.6} parent=0 // pred_check_branch
    %19 = sbr.rel (0) target = $region17
  $region16: #{_lambda_.6} parent=0 // pred_region
    _
  $region17: #{_lambda_.6} parent=0 // pred_fallthru
    _
  %v21 = vld [vmem:[%s0] sm:$0xf]
  %v22 = vld [vmem:[%s0 + $0x4] sm:$0xf]
  %v23 = vld [vmem:[%s1] sm:$0xf]
  %v24 = vld [vmem:[%s1 + $0x4] sm:$0xf]
  %v25 = vld [vmem:[%s1 + $0x8] sm:$0xf]
  %v26 = vld [vmem:[%s1 + $0xc] sm:$0xf]
  %v27 = vld [vmem:[%s1 + $0x10] sm:$0xf]
  %v28 = vld [vmem:[%s1 + $0x14] sm:$0xf]
  %v29 = vld [vmem:[%s1 + $0x18] sm:$0xf]
  %v30 = vld [vmem:[%s1 + $0x1c] sm:$0xf]
  %v31 = vld [vmem:[%s1 + $0x20] sm:$0xf]
  %v32 = vld [vmem:[%s2] sm:$0xf]
  %v33 = vld [vmem:[%s2 + $0x4] sm:$0xf]
  %v34 = vld [vmem:[%s3] sm:$0xf]
  %v35 = vld [vmem:[%s3 + $0x4] sm:$0xf]
  %v36 = vld [vmem:[%s3 + $0x8] sm:$0xf]
  %v37 = vld [vmem:[%s3 + $0xc] sm:$0xf]
  %v38 = vld [vmem:[%s3 + $0x10] sm:$0xf]
  %v39 = vld [vmem:[%s3 + $0x14] sm:$0xf]
  %v40 = vld [vmem:[%s3 + $0x18] sm:$0xf]
  %v41 = vld [vmem:[%s3 + $0x1c] sm:$0xf]
  %v42 = vld [vmem:[%s3 + $0x20] sm:$0xf]
  %v45 = vunpack.c.l.b16 %v32
  %v46 = vunpack.c.l.b16 %v33
  %v47 = vpack.c.b16 %v46, %v45
  %v57 = vunpack.c.l.b16 %v34
  %v58 = vunpack.c.l.b16 %v35
  %v59 = vunpack.c.l.b16 %v36
  %v60 = vunpack.c.l.b16 %v37
  %v61 = vunpack.c.l.b16 %v38
  %v62 = vunpack.c.l.b16 %v39
  %v63 = vunpack.c.l.b16 %v40
  %v64 = vunpack.c.l.b16 %v41
  %v65 = vunpack.c.l.b16 %v42
  %v66 = vpack.c.b16 %v58, %v57
  %v67 = vpack.c.b16 %v60, %v59
  %v68 = vpack.c.b16 %v62, %v61
  %v69 = vpack.c.b16 %v64, %v63
  %v70 = vpack.c.b16 %v65, %v65
  %vm75 = vcmask 588800
  %v77 = vsel %vm75, %v47, 0
  %vm79 = vcmask 1043456
  %v81 = vsel %vm79, %v70, 0
  %83 = vmatprep.subr.bf16.mxu0 0
  %84 = vmatpush1.bf16.msra.mxu0 0
  %85 = vmatprep.subr.bf16.mxu0 0
  %86 = vmatpush1.bf16.msra.mxu0 0
  %87 = vmatprep.subr.bf16.mxu0 0
  %88 = vmatpush1.bf16.msra.mxu0 0
  %89 = vmatprep.subr.bf16.mxu0 0
  %90 = vmatpush1.bf16.msra.mxu0 %v81
  %91 = vmatprep.subr.bf16.mxu0 0
  %92 = vmatpush1.bf16.msra.mxu0 %v69
  %93 = vmatprep.subr.bf16.mxu0 0
  %94 = vmatpush1.bf16.msra.mxu0 %v68
  %95 = vmatprep.subr.bf16.mxu0 0
  %96 = vmatpush1.bf16.msra.mxu0 %v67
  %97 = vmatprep.subr.bf16.mxu0 0
  %98 = vmatpush1.bf16.msra.mxu0 %v66
  %99 = vmatprep.subr.bf16.mxu0 0
  %100 = vmatpush2.bf16.msra.mxu0 0
  %101 = vmatprep.subr.bf16.mxu0 0
  %102 = vmatpush2.bf16.msra.mxu0 0
  %103 = vmatprep.subr.bf16.mxu0 0
  %104 = vmatpush2.bf16.msra.mxu0 0
  %105 = vmatprep.subr.bf16.mxu0 0
  %106 = vmatpush2.bf16.msra.mxu0 0
  %107 = vmatprep.subr.bf16.mxu0 0
  %108 = vmatpush2.bf16.msra.mxu0 0
  %109 = vmatprep.subr.bf16.mxu0 0
  %110 = vmatpush2.bf16.msra.mxu0 0
  %111 = vmatprep.subr.bf16.mxu0 0
  %112 = vmatpush2.bf16.msra.mxu0 0
  %113 = vmatprep.subr.bf16.mxu0 0
  %114 = vmatpush2.bf16.msra.mxu0 0
  %115 = vmatprep.mubr.bf16.mxu0 0
  %116 = vmatmul.mubr.bf16.gmra.mxu0 %v77
  %v117 = vpop.f32.mrf.mxu0
  %v118 = vadd.f32 0.0, %v117
  %v119 = vpop.f32.mrf.mxu0
  %v120 = vpop.f32.mrf.mxu0
  %v121 = vadd.f32 0.0, %v120
  %v122 = vpop.f32.mrf.mxu0
  %123 = vdwg.mxu0
  %v126 = vunpack.c.l.b16 %v21
  %v127 = vunpack.c.l.b16 %v22
  %v128 = vpack.c.b16 %v127, %v126
  %v138 = vunpack.c.l.b16 %v23
  %v139 = vunpack.c.l.b16 %v24
  %v140 = vunpack.c.l.b16 %v25
  %v141 = vunpack.c.l.b16 %v26
  %v142 = vunpack.c.l.b16 %v27
  %v143 = vunpack.c.l.b16 %v28
  %v144 = vunpack.c.l.b16 %v29
  %v145 = vunpack.c.l.b16 %v30
  %v146 = vunpack.c.l.b16 %v31
  %v147 = vpack.c.b16 %v139, %v138
  %v148 = vpack.c.b16 %v141, %v140
  %v149 = vpack.c.b16 %v143, %v142
  %v150 = vpack.c.b16 %v145, %v144
  %v151 = vpack.c.b16 %v146, %v146
  %v157 = vsel %vm75, %v128, 0
  %v160 = vsel %vm79, %v151, 0
  %162 = vmatprep.subr.bf16.mxu0 0
  %163 = vmatpush1.bf16.msra.mxu0 0
  %164 = vmatprep.subr.bf16.mxu0 0
  %165 = vmatpush1.bf16.msra.mxu0 0
  %166 = vmatprep.subr.bf16.mxu0 0
  %167 = vmatpush1.bf16.msra.mxu0 0
  %168 = vmatprep.subr.bf16.mxu0 0
  %169 = vmatpush1.bf16.msra.mxu0 %v160
  %170 = vmatprep.subr.bf16.mxu0 0
  %171 = vmatpush1.bf16.msra.mxu0 %v150
  %172 = vmatprep.subr.bf16.mxu0 0
  %173 = vmatpush1.bf16.msra.mxu0 %v149
  %174 = vmatprep.subr.bf16.mxu0 0
  %175 = vmatpush1.bf16.msra.mxu0 %v148
  %176 = vmatprep.subr.bf16.mxu0 0
  %177 = vmatpush1.bf16.msra.mxu0 %v147
  %178 = vmatprep.subr.bf16.mxu0 0
  %179 = vmatpush2.bf16.msra.mxu0 0
  %180 = vmatprep.subr.bf16.mxu0 0
  %181 = vmatpush2.bf16.msra.mxu0 0
  %182 = vmatprep.subr.bf16.mxu0 0
  %183 = vmatpush2.bf16.msra.mxu0 0
  %184 = vmatprep.subr.bf16.mxu0 0
  %185 = vmatpush2.bf16.msra.mxu0 0
  %186 = vmatprep.subr.bf16.mxu0 0
  %187 = vmatpush2.bf16.msra.mxu0 0
  %188 = vmatprep.subr.bf16.mxu0 0
  %189 = vmatpush2.bf16.msra.mxu0 0
  %190 = vmatprep.subr.bf16.mxu0 0
  %191 = vmatpush2.bf16.msra.mxu0 0
  %192 = vmatprep.subr.bf16.mxu0 0
  %193 = vmatpush2.bf16.msra.mxu0 0
  %194 = vmatprep.mubr.bf16.mxu0 0
  %195 = vmatmul.mubr.bf16.gmra.mxu0 %v157
  %v196 = vpop.f32.mrf.mxu0
  %v197 = vadd.f32 %v118, %v196
  %v198 = vpop.f32.mrf.mxu0
  %v199 = vpop.f32.mrf.mxu0
  %v200 = vadd.f32 %v121, %v199
  %v201 = vpop.f32.mrf.mxu0
  %202 = vdwg.mxu0
  %203 = vst [vmem:[%s4] sm:$0xff] %v197
  %204 = vst [vmem:[%s4 + $0x8] sm:$0xff] %v200
  %p205 = scmp.eq.s32.totalorder 0, 0
  // Predicated region
  $region18: #{_lambda_.6} parent=0 // pred_check
    %p206 = pneg %p205
  $region19: #{_lambda_.6} parent=0 // pred_check_branch
    %208 = sbr.rel (%p206) target = $region21
  $region20: #{_lambda_.6} parent=0 // pred_region
    %vm209 = vcmask 7168
    %210 = vst.msk [vmem:[%s5] sm:$0xff] %vm209, 0.0
    %211 = vst.msk [vmem:[%s5 + $0x8] sm:$0xff] %vm209, 0.0
    %212 = vst.msk [vmem:[%s6] sm:$0xff] %vm209, 0.0
    %213 = vst.msk [vmem:[%s6 + $0x8] sm:$0xff] %vm209, 0.0
  $region21: #{_lambda_.6} parent=0 // pred_fallthru
    _
  %v214 = vld [vmem:[%s5] sm:$0xff]
  %v215 = vld [vmem:[%s5 + $0x8] sm:$0xff]
  %216 = vadd.xlane.f32.xlu0 %v197
  %v217 = vpop.xlane.xlu0 %216
  %218 = vadd.xlane.f32.xlu0 %v200
  %v219 = vpop.xlane.xlu0 %218
  %v220 = vadd.f32 %v214, %v217
  %v221 = vadd.f32 %v215, %v219
  %vm222 = vcmask 7168
  %223 = vst.msk [vmem:[%s5] sm:$0xff] %vm222, %v220
  %224 = vst.msk [vmem:[%s5 + $0x8] sm:$0xff] %vm222, %v221
  %v225 = vld [vmem:[%s6] sm:$0xff]
  %v226 = vld [vmem:[%s6 + $0x8] sm:$0xff]
  %v227 = vmul.f32 %v197, %v197
  %v228 = vmul.f32 %v200, %v200
  %229 = vadd.xlane.f32.xlu0 %v227
  %v230 = vpop.xlane.xlu0 %229
  %231 = vadd.xlane.f32.xlu0 %v228
  %v232 = vpop.xlane.xlu0 %231
  %v233 = vadd.f32 %v225, %v230
  %v234 = vadd.f32 %v226, %v232
  %235 = vst.msk [vmem:[%s6] sm:$0xff] %vm222, %v233
  %236 = vst.msk [vmem:[%s6 + $0x8] sm:$0xff] %vm222, %v234
  // Predicated region
  $region22: #{_lambda_.6} parent=0 // pred_check
    _
  $region23: #{_lambda_.6} parent=0 // pred_check_branch
    %238 = sbr.rel (0) target = $region25
  $region24: #{_lambda_.6} parent=0 // pred_region
    _
  $region25: #{_lambda_.6} parent=0 // pred_fallthru
    _
  // Predicated region
  $region26: #{_lambda_.6} parent=0 // pred_check
    _
  $region27: #{_lambda_.6} parent=0 // pred_check_branch
    %240 = sbr.rel (0) target = $region29
  $region28: #{_lambda_.6} parent=0 // pred_region
    _
  $region29: #{_lambda_.6} parent=0 // pred_fallthru
    _
  // Predicated region
  $region30: #{_lambda_.6} parent=0 // pred_check
    _
  $region31: #{_lambda_.6} parent=0 // pred_check_branch
    %242 = sbr.rel (0) target = $region33
  $region32: #{_lambda_.6} parent=0 // pred_region
    _
  $region33: #{_lambda_.6} parent=0 // pred_fallthru
    _
  // Predicated region
  $region34: #{_lambda_.6} parent=0 // pred_check
    _
  $region35: #{_lambda_.6} parent=0 // pred_check_branch
    %244 = sbr.rel (0) target = $region37
  $region36: #{_lambda_.6} parent=0 // pred_region
    _
  $region37: #{_lambda_.6} parent=0 // pred_fallthru
    _
  // Predicated region
  $region38: #{_lambda_.6} parent=0 // pred_check
    _
  $region39: #{_lambda_.6} parent=0 // pred_check_branch
    %246 = sbr.rel (0) target = $region41
  $region40: #{_lambda_.6} parent=0 // pred_region
    _
  $region41: #{_lambda_.6} parent=0 // pred_fallthru
    _
  // Predicated region
  $region42: #{_lambda_.6} parent=0 // pred_check
    _
  $region43: #{_lambda_.6} parent=0 // pred_check_branch
    %248 = sbr.rel (0) target = $region45
  $region44: #{_lambda_.6} parent=0 // pred_region
    _
  $region45: #{_lambda_.6} parent=0 // pred_fallthru
    _

// kernel: tile.17
$region0: #{tile.17}
  #allocation0 [shape = 's32[1]{0}', space=sflag, size = 0x4, scoped, tag = 'scoped memory for tile.17']
  %s0 = inlined_call_operand.vmem [shape: f32[4], index: 0, kind: input, shape index: {}]
  %s1 = inlined_call_operand.vmem [shape: f32[4,4], index: 1, kind: output, shape index: {}]
  // Predicated region
  $region2: #{tile.17} parent=0 // pred_check
    _
  $region3: #{tile.17} parent=0 // pred_check_branch
    %3 = sbr.rel (0) target = $region5
  $region4: #{tile.17} parent=0 // pred_region
    _
  $region5: #{tile.17} parent=0 // pred_fallthru
    _
  %v4 = vld [vmem:[%s0] ss:$0 sm:$0xff]
  %5 = vst [vmem:[%s1] sm:$0xf] %v4

// kernel: tile.0
$region0: #{tile.0}
  %s0 = inlined_call_operand.vmem [shape: f32[4,4], index: 0, kind: input, shape index: {}]
  %s1 = inlined_call_operand.vmem [shape: f32[16,1], index: 1, kind: output, shape index: {}]
  $region1: #{tile.0} parent=0
    #allocation0 [shape = 'u8[4096]{0}', space=vmem, size = 0x1000, scoped, tag = 'scoped mem for input reshape']
    %s3 = sshll.u32 1, 4
    %s4 = ssub.s32 %s3, 1
    %v5 = vld [vmem:[%s0] sm:%s4]
    %6 = vst [vmem:[#allocation0] sm:%s4] %v5
    %v7 = vld [vmem:[#allocation0] sm:$0xf]
    %vm8 = vcmask 7168
    %9 = vst.msk [vmem:[%s1] ss:$4 sm:$0xf] %vm8, %v7
    %v10 = vld [vmem:[#allocation0] sm:$0xf]
    %11 = vrot.lane.b32.xlu0 %v10, 127
    %v12 = vpop.permute.xlu0 %11
    %vm13 = vcmask 7168
    %s14 = scalar_lea.vmem %s1, 1
    %15 = vst.msk [vmem:[%s14] ss:$4 sm:$0xf] %vm13, %v12
    %v16 = vld [vmem:[#allocation0] sm:$0xf]
    %17 = vrot.lane.b32.xlu0 %v16, 126
    %v18 = vpop.permute.xlu0 %17
    %vm19 = vcmask 7168
    %s20 = scalar_lea.vmem %s1, 2
    %21 = vst.msk [vmem:[%s20] ss:$4 sm:$0xf] %vm19, %v18
    %v22 = vld [vmem:[#allocation0] sm:$0xf]
    %23 = vrot.lane.b32.xlu0 %v22, 125
    %v24 = vpop.permute.xlu0 %23
    %vm25 = vcmask 7168
    %s26 = scalar_lea.vmem %s1, 3
    %27 = vst.msk [vmem:[%s26] ss:$4 sm:$0xf] %vm25, %v24

// kernel: _lambda_.7
$region0: #{_lambda_.7}
  #allocation0 [shape = 'u32[]', space=smem, size = 0x4, offset = 0x4, fixed_abs, tag = 'smem constant byte address 0x4 - core index']
  #allocation1 [shape = 'u32[144,128]{1,0:T(1,128)}', space=vmem, size = 0x12000, scoped, tag = 'internal scratch']
  %s0 = inlined_call_operand.vmem [shape: f32[16,128], index: 0, kind: input, shape index: {}]
  %s1 = inlined_call_operand.vmem [shape: f32[16,1], index: 1, kind: input, shape index: {}]
  %s2 = inlined_call_operand.vmem [shape: f32[16,1], index: 2, kind: input, shape index: {}]
  %s3 = inlined_call_operand.vmem [shape: f32[16,128], index: 3, kind: output, shape index: {}]
  %s4 = sld [smem:[#allocation0]]
  $region22: #{_lambda_.7} parent=0
    _
  %s6 = ssub.s32 1, %s4
  %s7 = scalar_select 0, %s6, %s4
  // Predicated region
  $region2: #{_lambda_.7} parent=0 // pred_check
    _
  $region3: #{_lambda_.7} parent=0 // pred_check_branch
    %9 = sbr.rel (0) target = $region5
  $region4: #{_lambda_.7} parent=0 // pred_region
    _
  $region5: #{_lambda_.7} parent=0 // pred_fallthru
    _
  // Predicated region
  $region6: #{_lambda_.7} parent=0 // pred_check
    _
  $region7: #{_lambda_.7} parent=0 // pred_check_branch
    %11 = sbr.rel (0) target = $region9
  $region8: #{_lambda_.7} parent=0 // pred_region
    _
  $region9: #{_lambda_.7} parent=0 // pred_fallthru
    _
  // Predicated region
  $region10: #{_lambda_.7} parent=0 // pred_check
    _
  $region11: #{_lambda_.7} parent=0 // pred_check_branch
    %13 = sbr.rel (0) target = $region13
  $region12: #{_lambda_.7} parent=0 // pred_region
    _
  $region13: #{_lambda_.7} parent=0 // pred_fallthru
    _
  %v14 = vld [vmem:[%s0] sm:$0xff]
  %v15 = vld [vmem:[%s0 + $0x8] sm:$0xff]
  %v16 = vld [vmem:[%s1] sm:$0xff]
  %v17 = vld [vmem:[%s1 + $0x8] sm:$0xff]
  %19 = vset.pattern.permute.xlu0 0
  %20 = vperm.xlu0 %19, %v16
  %v21 = vpop.permute.xlu0 %20
  %24 = vset.pattern.permute.xlu0 0
  %25 = vperm.xlu0 %24, %v17
  %v26 = vpop.permute.xlu0 %25
  %v28 = vmul.f32 %v14, %v21
  %v29 = vmul.f32 %v15, %v26
  %v30 = vld [vmem:[%s2] sm:$0xff]
  %v31 = vld [vmem:[%s2 + $0x8] sm:$0xff]
  %33 = vset.pattern.permute.xlu0 0
  %34 = vperm.xlu0 %33, %v30
  %v35 = vpop.permute.xlu0 %34
  %38 = vset.pattern.permute.xlu0 0
  %39 = vperm.xlu0 %38, %v31
  %v40 = vpop.permute.xlu0 %39
  %v42 = vadd.f32 %v28, %v35
  %v43 = vadd.f32 %v29, %v40
  %vm44 = vcmp.ge.f32.partialorder %v42, 0.0
  %vm45 = vcmp.ge.f32.partialorder %v43, 0.0
  %v46 = vmul.f32 %v42, 0.0
  %v47 = vmul.f32 %v43, 0.0
  %v48 = vsel %vm44, %v42, %v46
  %v49 = vsel %vm45, %v43, %v47
  %50 = vst [vmem:[%s3] sm:$0xff] %v48
  %51 = vst [vmem:[%s3 + $0x8] sm:$0xff] %v49
  // Predicated region
  $region14: #{_lambda_.7} parent=0 // pred_check
    _
  $region15: #{_lambda_.7} parent=0 // pred_check_branch
    %53 = sbr.rel (0) target = $region17
  $region16: #{_lambda_.7} parent=0 // pred_region
    _
  $region17: #{_lambda_.7} parent=0 // pred_fallthru
    _
  // Predicated region
  $region18: #{_lambda_.7} parent=0 // pred_check
    _
  $region19: #{_lambda_.7} parent=0 // pred_check_branch
    %55 = sbr.rel (0) target = $region21
  $region20: #{_lambda_.7} parent=0 // pred_region
    _
  $region21: #{_lambda_.7} parent=0 // pred_fallthru
    _

</llo_original>
